<compile_context>
chip_gen: v6e
topology: v6e:2x2x1
jax: 0.10.0
libtpu: 0.0.40
codegen_flags: <defaults>
</compile_context>

<pallas_src>
import functools

import jax
import jax.numpy as jnp
from jax.experimental import pallas as pl
from jax.experimental.pallas import tpu as pltpu


# ------------------------------- kernel ---------------------------------------
def _swishglu_kernel(x_ref, w_ref, b_ref, o_ref, acc_ref, *, out_dim, mxu_dtype):
    """One (row-tile, k-tile) grid step.

    x_ref:   (tm, tk)          activation tile
    w_ref:   (tk, 2*out_dim)   weight K-slice (row-grid invariant)
    b_ref:   (1, 2*out_dim)    bias
    o_ref:   (tm, out_dim)     output tile
    acc_ref: (tm, 2*out_dim)   f32 accumulator scratch, lives across the K axis
    """
    k = pl.program_id(1)

    @pl.when(k == 0)
    def _init():
        acc_ref[...] = jnp.zeros_like(acc_ref)

    a = x_ref[...]
    w = w_ref[...]
    if mxu_dtype is not None:
        a = a.astype(mxu_dtype)          # bf16 operands -> full-rate MXU (f32 acc)
        w = w.astype(mxu_dtype)
    acc_ref[...] += jnp.dot(a, w, preferred_element_type=jnp.float32)

    @pl.when(k == pl.num_programs(1) - 1)
    def _epilogue():
        h = acc_ref[...] + b_ref[...]    # f32 epilogue (v5e-safe: no bf16 VPU/EUP work)
        projected = h[:, :out_dim]       # 128-lane-aligned slice (no relayout)
        gate = h[:, out_dim:]
        o_ref[...] = (projected * gate * jax.nn.sigmoid(gate)).astype(o_ref.dtype)


# ------------------------------ tiling helpers ---------------------------------
def _round_up(v, mult):
    return ((v + mult - 1) // mult) * mult


def _pick_row_tile(m, block_rows):
    block_rows = max(8, (block_rows // 8) * 8)
    tm = min(block_rows, _round_up(m, 8))
    if m <= tm and m >= 16:
        # Split into (at least) two row tiles so both v7x TensorCores get work.
        tm = _round_up((m + 1) // 2, 8)
    return tm


def _pick_k_tile(in_dim, block_k):
    if in_dim <= block_k:
        return in_dim                         # whole-K in one slice
    for cand in range(block_k, 127, -128):    # largest 128-multiple divisor of in_dim
        if in_dim % cand == 0:
            return cand
    return in_dim                             # no clean divisor: fall back to whole-K


# ------------------------------ wrapper ---------------------------------------
def swishglu(x, w, b, *, block_rows=512, block_k=512, mxu_dtype=jnp.bfloat16):
    """Fused SwishGLU: (x @ w + b) -> projected * SiLU(gate).

    x: (..., in_dim); w: (in_dim, 2*out_dim); b: (2*out_dim,) -> (..., out_dim).
    mxu_dtype: dtype the matmul operands are cast to inside the kernel (accumulation
      is always f32); pass None to matmul in the input dtype.
    """
    in_dim = x.shape[-1]
    assert w.shape[0] == in_dim and w.shape[1] % 2 == 0, w.shape
    two_out = w.shape[1]
    out_dim = two_out // 2
    # The projected/gate split and the output store rely on 128-lane alignment;
    # a misaligned out_dim would silently hit a ~4.5x masked-store perf cliff.
    assert out_dim % 128 == 0, f"out_dim must be a multiple of 128, got {out_dim}"

    lead_shape = x.shape[:-1]
    x2 = x.reshape(-1, in_dim)                 # flatten all leading dims into rows
    m = x2.shape[0]

    tm = _pick_row_tile(m, block_rows)
    tk = _pick_k_tile(in_dim, block_k)
    grid = (pl.cdiv(m, tm), in_dim // tk)      # rows parallel, K reduction last

    b2 = b.astype(jnp.float32).reshape(1, two_out)
    out_dtype = x.dtype
    x_bytes = jnp.dtype(x.dtype).itemsize
    w_bytes = jnp.dtype(w.dtype).itemsize
    o_bytes = jnp.dtype(out_dtype).itemsize

    # Resident VMEM: double-buffered x / w / out tiles + f32 accumulator + bias.
    vmem_est = (2 * tm * tk * x_bytes
                + 2 * tk * two_out * w_bytes
                + 2 * tm * out_dim * o_bytes
                + tm * two_out * 4
                + 2 * two_out * 4)
    vmem_limit = int(min(max(vmem_est * 1.3, 32 * 1024 * 1024), 64 * 1024 * 1024))

    cost = pl.CostEstimate(
        flops=2 * m * in_dim * two_out + 4 * m * out_dim,
        transcendentals=m * out_dim,           # sigmoid
        bytes_accessed=(m * in_dim * x_bytes + in_dim * two_out * w_bytes
                        + two_out * 4 + m * out_dim * o_bytes),
    )

    out = pl.pallas_call(
        functools.partial(_swishglu_kernel, out_dim=out_dim, mxu_dtype=mxu_dtype),
        out_shape=jax.ShapeDtypeStruct((m, out_dim), out_dtype),
        grid_spec=pltpu.PrefetchScalarGridSpec(
            num_scalar_prefetch=0,
            grid=grid,
            in_specs=[
                pl.BlockSpec((tm, tk), lambda i, k: (i, k)),        # x row/K tile
                pl.BlockSpec((tk, two_out), lambda i, k: (k, 0)),   # weight K slice
                pl.BlockSpec((1, two_out), lambda i, k: (0, 0)),    # bias (invariant)
            ],
            out_specs=pl.BlockSpec((tm, out_dim), lambda i, k: (i, 0)),
            scratch_shapes=[pltpu.VMEM((tm, two_out), jnp.float32)],
        ),
        compiler_params=pltpu.CompilerParams(
            dimension_semantics=("parallel", "arbitrary"),
            vmem_limit_bytes=vmem_limit,
        ),
        cost_estimate=cost,
    )(x2, w, b2)

    return out.reshape(*lead_shape, out_dim)


# --------------------------- pure-JAX references --------------------------------
def swishglu_reference(x, w, b, *, operand_dtype=None):
    out_dim = w.shape[1] // 2
    if operand_dtype is None:
        h = jnp.dot(x, w, precision=jax.lax.Precision.HIGHEST)
    else:
        h = jnp.dot(x.astype(operand_dtype), w.astype(operand_dtype),
                    preferred_element_type=jnp.float32)
    h = h + b.astype(h.dtype)
    projected, gate = h[..., :out_dim], h[..., out_dim:]
    return (projected * gate * jax.nn.sigmoid(gate)).astype(x.dtype)


# --------------------------------- main -----------------------------------------
if __name__ == "__main__":
    key = jax.random.PRNGKey(0)
    kx1, kx2, kw, kb = jax.random.split(key, 4)

    IN_DIM, OUT_DIM = 128, 128
    bound = 1.0 / (IN_DIM ** 0.5)              # torch nn.Linear default init range
    w = jax.random.uniform(kw, (IN_DIM, 2 * OUT_DIM), jnp.float32, -bound, bound)
    b = jax.random.uniform(kb, (2 * OUT_DIM,), jnp.float32, -bound, bound)

    # Case 1: even rows (2*128 = 256 -> two parallel 128-row tiles).
    x_even = jax.random.normal(kx1, (2, 128, IN_DIM), jnp.float32)
    # Case 2: ragged rows (2*100 = 200) -> exercises the masked edge block (no pad/unpad).
    x_ragged = jax.random.normal(kx2, (2, 100, IN_DIM), jnp.float32)

    for x in (x_even, x_ragged):
        out = jax.block_until_ready(swishglu(x, w, b))
        assert out.shape == x.shape[:-1] + (OUT_DIM,)

        # Matched-precision check (bf16 MXU operands, f32 accumulation) — tight.
        ref_bf16 = swishglu_reference(x, w, b, operand_dtype=jnp.bfloat16)
        assert jnp.allclose(out, ref_bf16, atol=2e-3, rtol=2e-3), \
            float(jnp.max(jnp.abs(out - ref_bf16)))

        # Full-f32 reference — loose tolerance bounds the bf16 operand drift.
        ref_f32 = swishglu_reference(x, w, b)
        assert jnp.allclose(out, ref_f32, atol=5e-2, rtol=5e-2), \
            float(jnp.max(jnp.abs(out - ref_f32)))

    print("KERNEL_OK")
</pallas_src>

<mosaic_0001>
module attributes {stable_mosaic.version = 11 : i64} {
  func.func @_swishglu_kernel(%arg0: i32, %arg1: i32, %arg2: memref<128x128xf32, #tpu.memory_space<vmem>>, %arg3: memref<128x256xf32, #tpu.memory_space<vmem>>, %arg4: memref<1x256xf32, #tpu.memory_space<vmem>>, %arg5: memref<128x128xf32, #tpu.memory_space<vmem>>, %arg6: memref<128x256xf32, #tpu.memory_space<vmem>>) attributes {dimension_semantics = [#tpu.dimension_semantics<parallel>, #tpu.dimension_semantics<arbitrary>], iteration_bounds = array<i64: 2, 1>, scalar_prefetch = 0 : i64, scratch_operands = 1 : i64, tpu.core_type = #tpu.core_type<tc>, window_params = [{transform_indices = @transform_0, window_bounds = array<i64: 128, 128>}, {transform_indices = @transform_1, window_bounds = array<i64: 128, 256>}, {pipeline_mode = #tpu.pipeline_mode<synchronous>, transform_indices = @transform_2, window_bounds = array<i64: 1, 256>}, {transform_indices = @transform_3, window_bounds = array<i64: 128, 128>}]} {
    %c0_i32 = arith.constant 0 : i32
    %0 = arith.cmpi eq, %arg1, %c0_i32 : i32
    %1 = arith.extui %0 : i1 to i32
    %c0_i32_0 = arith.constant 0 : i32
    %2 = arith.cmpi ne, %1, %c0_i32_0 : i32
    scf.if %2 {
      %cst_10 = arith.constant 0.000000e+00 : f32
      %14 = vector.broadcast %cst_10 : f32 to vector<128x256xf32>
      %c0_11 = arith.constant 0 : index
      %c0_12 = arith.constant 0 : index
      %15 = vector.load %arg6[%c0_11, %c0_12] : memref<128x256xf32, #tpu.memory_space<vmem>>, vector<128x256xf32>
      tpu.vector_store %arg6[%c0_11, %c0_12], %14 {strides = array<i32>} : memref<128x256xf32, #tpu.memory_space<vmem>>, vector<128x256xf32>,
    } else {
    }
    %c0 = arith.constant 0 : index
    %c0_1 = arith.constant 0 : index
    %3 = vector.load %arg2[%c0, %c0_1] : memref<128x128xf32, #tpu.memory_space<vmem>>, vector<128x128xf32>
    %c0_2 = arith.constant 0 : index
    %c0_3 = arith.constant 0 : index
    %4 = vector.load %arg3[%c0_2, %c0_3] : memref<128x256xf32, #tpu.memory_space<vmem>>, vector<128x256xf32>
    %5 = arith.truncf %3 : vector<128x128xf32> to vector<128x128xbf16>
    %6 = arith.truncf %4 : vector<128x256xf32> to vector<128x256xbf16>
    %c0_4 = arith.constant 0 : index
    %c0_5 = arith.constant 0 : index
    %7 = vector.load %arg6[%c0_4, %c0_5] : memref<128x256xf32, #tpu.memory_space<vmem>>, vector<128x256xf32>
    %cst = arith.constant dense<0.000000e+00> : vector<128x256xf32>
    %8 = tpu.matmul %5, %6, %cst {dimension_numbers = #tpu.dot_dimension_numbers<[1], [0], [0], [1], [0, 0, 1, 1], [], []>} : vector<128x128xbf16>, vector<128x256xbf16>, vector<128x256xf32> -> vector<128x256xf32>
    %9 = arith.addf %7, %8 : vector<128x256xf32>
    %c0_6 = arith.constant 0 : index
    %c0_7 = arith.constant 0 : index
    %10 = vector.load %arg6[%c0_6, %c0_7] : memref<128x256xf32, #tpu.memory_space<vmem>>, vector<128x256xf32>
    tpu.vector_store %arg6[%c0_6, %c0_7], %9 {strides = array<i32>} : memref<128x256xf32, #tpu.memory_space<vmem>>, vector<128x256xf32>,
    %c0_i32_8 = arith.constant 0 : i32
    %11 = arith.cmpi eq, %arg1, %c0_i32_8 : i32
    %12 = arith.extui %11 : i1 to i32
    %c0_i32_9 = arith.constant 0 : i32
    %13 = arith.cmpi ne, %12, %c0_i32_9 : i32
    scf.if %13 {
      %c0_10 = arith.constant 0 : index
      %c0_11 = arith.constant 0 : index
      %14 = vector.load %arg6[%c0_10, %c0_11] : memref<128x256xf32, #tpu.memory_space<vmem>>, vector<128x256xf32>
      %c0_12 = arith.constant 0 : index
      %c0_13 = arith.constant 0 : index
      %15 = vector.load %arg4[%c0_12, %c0_13] : memref<1x256xf32, #tpu.memory_space<vmem>>, vector<1x256xf32>
      %16 = vector.broadcast %15 : vector<1x256xf32> to vector<128x256xf32>
      %17 = arith.addf %14, %16 : vector<128x256xf32>
      %18 = vector.extract_strided_slice %17 {offsets = [0, 0], sizes = [128, 128], strides = [1, 1]} : vector<128x256xf32> to vector<128x128xf32>
      %19 = vector.extract_strided_slice %17 {offsets = [0, 128], sizes = [128, 128], strides = [1, 1]} : vector<128x256xf32> to vector<128x128xf32>
      %20 = arith.mulf %18, %19 : vector<128x128xf32>
      %21 = arith.negf %19 : vector<128x128xf32>
      %22 = math.exp %21 : vector<128x128xf32>
      %cst_14 = arith.constant 1.000000e+00 : f32
      %23 = vector.broadcast %cst_14 : f32 to vector<128x128xf32>
      %24 = arith.addf %23, %22 : vector<128x128xf32>
      %25 = arith.divf %23, %24 : vector<128x128xf32>
      %26 = arith.mulf %20, %25 : vector<128x128xf32>
      %c0_15 = arith.constant 0 : index
      %c0_16 = arith.constant 0 : index
      %27 = vector.load %arg5[%c0_15, %c0_16] : memref<128x128xf32, #tpu.memory_space<vmem>>, vector<128x128xf32>
      tpu.vector_store %arg5[%c0_15, %c0_16], %26 {strides = array<i32>} : memref<128x128xf32, #tpu.memory_space<vmem>>, vector<128x128xf32>,
    } else {
    }
    return
  }
  func.func @transform_0(%arg0: i32, %arg1: i32) -> (i32, i32) {
    %c0_i32 = arith.constant 0 : i32
    return %arg0, %arg1 : i32, i32
  }
  func.func @transform_1(%arg0: i32, %arg1: i32) -> (i32, i32) {
    %c0_i32 = arith.constant 0 : i32
    %c0_i32_0 = arith.constant 0 : i32
    return %arg1, %c0_i32 : i32, i32
  }
  func.func @transform_2(%arg0: i32, %arg1: i32) -> (i32, i32) {
    %c0_i32 = arith.constant 0 : i32
    %c0_i32_0 = arith.constant 0 : i32
    %c0_i32_1 = arith.constant 0 : i32
    return %c0_i32, %c0_i32_0 : i32, i32
  }
  func.func @transform_3(%arg0: i32, %arg1: i32) -> (i32, i32) {
    %c0_i32 = arith.constant 0 : i32
    %c0_i32_0 = arith.constant 0 : i32
    return %arg0, %c0_i32 : i32, i32
  }
}

</mosaic_0001>

<llo_original>
// kernel: tpu_custom_call.1
$region0: #{tpu_custom_call.1}
  #allocation0 [shape = 'u32[]', space=smem, size = 0x4, offset = 0x4, fixed_abs, tag = 'smem constant byte address 0x4 - core index']
  #allocation1 [shape = 'u32[144,128]{1,0:T(1,128)}', space=vmem, size = 0x12000, scoped, tag = 'internal scratch']
  #allocation2 [shape = 'f32[128,256]{1,0:T(8,128)}', space=vmem, size = 0x20000, scoped, tag = 'scratch operand']
  %s0 = inlined_call_operand.hbm [shape: f32[256,128], index: 0, kind: input, shape index: {}]
  %s1 = inlined_call_operand.hbm [shape: f32[128,256], index: 1, kind: input, shape index: {}]
  %s2 = inlined_call_operand.vmem [shape: f32[1,256], index: 2, kind: input, shape index: {}]
  %s3 = inlined_call_operand.hbm [shape: f32[256,128], index: 3, kind: output, shape index: {}]
  %s4 = sld [smem:[#allocation0]]
  $region61: #{tpu_custom_call.1} parent=0
    _
  %s6 = ssub.s32 1, %s4
  %s7 = scalar_select 0, %s6, %s4
  $region1: #{tpu_custom_call.1} parent=0
    #allocation3 [shape = 'u8[131072]{0}', space=vmem, size = 0x20000, scoped, tag = 'input window, operand 0']
    #allocation4 [shape = 's32[2]{0}', space=sflag, size = 0x8, scoped, tag = 'scoped memory for tpu_custom_call.1']
    #allocation5 [shape = 's32[2]{0}', space=sflag, size = 0x8, scoped, tag = 'scoped memory for tpu_custom_call.1']
    #allocation6 [shape = 'u8[131072]{0}', space=vmem, size = 0x20000, scoped, tag = 'input window, operand 1, single buffered']
    #allocation7 [shape = 's32[1]{0}', space=sflag, size = 0x4, scoped, tag = 'scoped memory for tpu_custom_call.1']
    #allocation8 [shape = 'u8[131072]{0}', space=vmem, size = 0x20000, scoped, tag = 'output window, operand 0']
    %8 = vsyncpa [#allocation4], 0
    %s9 = scalar_lea.sflag [#allocation4], 1
    %10 = vsyncpa %s9, 0
    %11 = vsyncpa [#allocation7], 0
    %12 = vsyncpa [#allocation5], 0
    %s13 = scalar_lea.sflag [#allocation5], 1
    %14 = vsyncpa %s13, 0
    loop: start=0, step=1, limit=4
    $region2: #{tpu_custom_call.1} parent=1 // loop_pre_header
      _
    $region3: #{tpu_custom_call.1} parent=1 // loop_header
      %s16 = sphi 0, %s20
      %p17 = scmp.ge.s32.totalorder %s16, 4
      %s23 = sphi 0, %s35
      %s24 = sphi 0, %s31
      %s25 = sphi 0, %s23
      %s26 = sphi 0, %s24
      %s27 = sphi 0, %s25
      %s28 = sphi 0, %s26
      %s40 = sphi 0, %s42
      %s43 = sphi 0, %s40
      %s44 = sphi 0, %s43
      %s60 = sphi 0, %s44
      %s66 = sphi 0, %s68
      %s69 = sphi 0, %s66
      %s70 = sphi 0, %s69
      %s86 = sphi 0, %s70
      %s90 = sphi 0, %s90
      %s92 = sphi 0, %s90
      %s93 = sphi 0, %s92
      %s107 = sphi 0, %s93
      %s113 = sphi 0, %s115
      %s116 = sphi 0, %s113
      %s117 = sphi 0, %s116
      %s133 = sphi 0, %s117
    $region4: #{tpu_custom_call.1} parent=1 // loop_header_branch
      %19 = sbr.rel (%p17) target = $region8
    $region5: #{tpu_custom_call.1} parent=1 // loop_body
      %s21 = ssub.s32 %s16, 1
      %s22 = ssub.s32 %s16, 2
      %s29 = sadd.s32 1, %s24
      %p30 = scmp.ge.s32.totalorder %s29, 1
      %s31 = scalar_select %p30, 0, %s29
      %s32 = sadd.s32 1, %s23
      %s33 = scalar_select %p30, %s32, %s23
      %p34 = scmp.ge.s32.totalorder %s33, 2
      %s35 = scalar_select %p34, 0, %s33
      %s36 = ssub.s32 %s23, %s35
      %s37 = ssub.s32 %s24, %s31
      %s38 = sor.u32 %s36, %s37
      %p39 = scmp.eq.s32.totalorder %s38, 0
      %s41 = sadd.s32 %s40, 1
      %s42 = scalar_select %p39, %s40, %s41
      %p45 = pneg %p39
      %p46 = scmp.eq.s32.totalorder %s16, 1
      %p47 = por %p45, %p46
      %p48 = scmp.ne.s32.totalorder %s40, %s43
      %p49 = scmp.eq.s32.totalorder %s16, 0
      %p50 = por %p48, %p49
      %p51 = scmp.ne.s32.totalorder %s40, %s43
      %p52 = scmp.eq.s32.totalorder %s21, 1
      %p53 = por %p51, %p52
      %p54 = scmp.ne.s32.totalorder %s43, %s44
      %p55 = scmp.eq.s32.totalorder %s21, 0
      %p56 = por %p54, %p55
      %p57 = scmp.ne.s32.totalorder %s43, %s44
      %p58 = scmp.eq.s32.totalorder %s22, 1
      %p59 = por %p57, %p58
      %p61 = scmp.ne.s32.totalorder %s44, %s60
      %p62 = scmp.eq.s32.totalorder %s22, 0
      %p63 = por %p61, %p62
      %s64 = ssub.s32 %s24, %s31
      %p65 = scmp.eq.s32.totalorder %s64, 0
      %s67 = sadd.s32 %s66, 1
      %s68 = scalar_select %p65, %s66, %s67
      %p71 = pneg %p65
      %p72 = scmp.eq.s32.totalorder %s16, 1
      %p73 = por %p71, %p72
      %p74 = scmp.ne.s32.totalorder %s66, %s69
      %p75 = scmp.eq.s32.totalorder %s16, 0
      %p76 = por %p74, %p75
      %p77 = scmp.ne.s32.totalorder %s66, %s69
      %p78 = scmp.eq.s32.totalorder %s21, 1
      %p79 = por %p77, %p78
      %p80 = scmp.ne.s32.totalorder %s69, %s70
      %p81 = scmp.eq.s32.totalorder %s21, 0
      %p82 = por %p80, %p81
      %p83 = scmp.ne.s32.totalorder %s69, %s70
      %p84 = scmp.eq.s32.totalorder %s22, 1
      %p85 = por %p83, %p84
      %p87 = scmp.ne.s32.totalorder %s70, %s86
      %p88 = scmp.eq.s32.totalorder %s22, 0
      %p89 = por %p87, %p88
      %s91 = sadd.s32 %s90, 1
      %p94 = scmp.eq.s32.totalorder %s16, 1
      %p95 = scmp.ne.s32.totalorder %s90, %s92
      %p96 = scmp.eq.s32.totalorder %s16, 0
      %p97 = por %p95, %p96
      %p98 = scmp.ne.s32.totalorder %s90, %s92
      %p99 = scmp.eq.s32.totalorder %s21, 1
      %p100 = por %p98, %p99
      %p101 = scmp.ne.s32.totalorder %s92, %s93
      %p102 = scmp.eq.s32.totalorder %s21, 0
      %p103 = por %p101, %p102
      %p104 = scmp.ne.s32.totalorder %s92, %s93
      %p105 = scmp.eq.s32.totalorder %s22, 1
      %p106 = por %p104, %p105
      %p108 = scmp.ne.s32.totalorder %s93, %s107
      %p109 = scmp.eq.s32.totalorder %s22, 0
      %p110 = por %p108, %p109
      %s111 = ssub.s32 %s23, %s35
      %p112 = scmp.eq.s32.totalorder %s111, 0
      %s114 = sadd.s32 %s113, 1
      %s115 = scalar_select %p112, %s113, %s114
      %p118 = pneg %p112
      %p119 = scmp.eq.s32.totalorder %s16, 1
      %p120 = por %p118, %p119
      %p121 = scmp.ne.s32.totalorder %s113, %s116
      %p122 = scmp.eq.s32.totalorder %s16, 0
      %p123 = por %p121, %p122
      %p124 = scmp.ne.s32.totalorder %s113, %s116
      %p125 = scmp.eq.s32.totalorder %s21, 1
      %p126 = por %p124, %p125
      %p127 = scmp.ne.s32.totalorder %s116, %s117
      %p128 = scmp.eq.s32.totalorder %s21, 0
      %p129 = por %p127, %p128
      %p130 = scmp.ne.s32.totalorder %s116, %s117
      %p131 = scmp.eq.s32.totalorder %s22, 1
      %p132 = por %p130, %p131
      %p134 = scmp.ne.s32.totalorder %s117, %s133
      %p135 = scmp.eq.s32.totalorder %s22, 0
      %p136 = por %p134, %p135
      %p137 = scmp.le.s32.totalorder 1, %s16
      %p138 = scmp.lt.s32.totalorder %s16, 3
      %p139 = pnand %p137, %p138
      %p140 = pneg %p139
      // Predicated region
      $region9: #{tpu_custom_call.1} parent=5 // pred_check
        _
      $region10: #{tpu_custom_call.1} parent=5 // pred_check_branch
        %142 = sbr.rel (%p139) target = $region12
      $region11: #{tpu_custom_call.1} parent=5 // pred_region
        %s143 = ssub.s32 %s16, 1
        // Predicated region
        $region13: #{tpu_custom_call.1} parent=11 // pred_check
          %p144 = pneg %p82
        $region14: #{tpu_custom_call.1} parent=11 // pred_check_branch
          %146 = sbr.rel (%p144) target = $region16
        $region15: #{tpu_custom_call.1} parent=11 // pred_region
          %s147 = smul.u32 16, %s26
          %s149 = ssub.s32 4096, 4096
          %150 = vsyncadd [#allocation7], %s149
          %s151 = smul.addr %s147, 2
          %s152 = smul.addr %s151, 128
          %s153 = scalar_lea.hbm %s1, %s152
          %s154 = sshll.u32 [#allocation6], 4
          %s155 = int_to_ptr.vmem [resolvable:$true] %s154
          %160 = dma.hbm_to_vmem [thread:$0]  %s153, 4096, %s155, [#allocation7], 256, 256, 16
        $region16: #{tpu_custom_call.1} parent=11 // pred_fallthru
          _
        // Predicated region
        $region17: #{tpu_custom_call.1} parent=11 // pred_check
          %p161 = pneg %p103
        $region18: #{tpu_custom_call.1} parent=11 // pred_check_branch
          %163 = sbr.rel (%p161) target = $region20
        $region19: #{tpu_custom_call.1} parent=11 // pred_region
          _
        $region20: #{tpu_custom_call.1} parent=11 // pred_fallthru
          _
      $region12: #{tpu_custom_call.1} parent=5 // pred_fallthru
        _
      %p164 = scmp.lt.s32.totalorder %s16, 2
      // Predicated region
      $region21: #{tpu_custom_call.1} parent=5 // pred_check
        %p165 = pneg %p164
      $region22: #{tpu_custom_call.1} parent=5 // pred_check_branch
        %167 = sbr.rel (%p165) target = $region24
      $region23: #{tpu_custom_call.1} parent=5 // pred_region
        // Predicated region
        $region25: #{tpu_custom_call.1} parent=23 // pred_check
          %p168 = pneg %p50
        $region26: #{tpu_custom_call.1} parent=23 // pred_check_branch
          %170 = sbr.rel (%p168) target = $region28
        $region27: #{tpu_custom_call.1} parent=23 // pred_region
          %s171 = sand.u32 %s40, 1
          %s172 = scalar_lea.sflag [#allocation4], %s171
          %s173 = sand.u32 %s40, 1
          %s174 = smul.addr %s173, 128
          %s175 = scalar_lea.vmem [#allocation3], %s174
          %s176 = smul.u32 16, %s23
          %s178 = ssub.s32 2048, 2048
          %179 = vsyncadd %s172, %s178
          %s180 = sadd.s32 %s24, %s176
          %s181 = smul.addr %s180, 128
          %s182 = scalar_lea.hbm %s0, %s181
          %s183 = sshll.u32 %s175, 4
          %s184 = int_to_ptr.vmem [resolvable:$true] %s183
          %189 = dma.hbm_to_vmem [thread:$0]  %s182, 2048, %s184, %s172, 128, 128, 8
        $region28: #{tpu_custom_call.1} parent=23 // pred_fallthru
          _
      $region24: #{tpu_custom_call.1} parent=5 // pred_fallthru
        _
      %p190 = scmp.le.s32.totalorder 1, %s16
      %p191 = scmp.lt.s32.totalorder %s16, 3
      %p192 = pnand %p190, %p191
      %p193 = pneg %p192
      // Predicated region
      $region29: #{tpu_custom_call.1} parent=5 // pred_check
        _
      $region30: #{tpu_custom_call.1} parent=5 // pred_check_branch
        %195 = sbr.rel (%p192) target = $region32
      $region31: #{tpu_custom_call.1} parent=5 // pred_region
        %s196 = ssub.s32 %s16, 1
        %s197 = sand.u32 %s43, 1
        %s198 = scalar_lea.sflag [#allocation4], %s197
        %s199 = sand.u32 %s43, 1
        %s200 = smul.addr %s199, 128
        %s201 = scalar_lea.vmem [#allocation3], %s200
        // Predicated region
        $region33: #{tpu_custom_call.1} parent=31 // pred_check
          %p202 = pneg %p56
        $region34: #{tpu_custom_call.1} parent=31 // pred_check_branch
          %204 = sbr.rel (%p202) target = $region36
        $region35: #{tpu_custom_call.1} parent=31 // pred_region
          %205 = dma.done %s198, 2048
        $region36: #{tpu_custom_call.1} parent=31 // pred_fallthru
          _
        // Predicated region
        $region37: #{tpu_custom_call.1} parent=31 // pred_check
          %p206 = pneg %p82
        $region38: #{tpu_custom_call.1} parent=31 // pred_check_branch
          %208 = sbr.rel (%p206) target = $region40
        $region39: #{tpu_custom_call.1} parent=31 // pred_region
          %209 = dma.done [#allocation7], 4096
        $region40: #{tpu_custom_call.1} parent=31 // pred_fallthru
          _
        %s210 = sand.u32 %s43, 1
        %s211 = scalar_lea.sflag [#allocation4], %s210
        %s212 = sand.u32 %s43, 1
        %s213 = smul.addr %s212, 128
        %s214 = scalar_lea.vmem [#allocation3], %s213
        %p215 = pneg %p56
        %p216 = pneg %p53
        %p217 = pneg %p82
        %p218 = pneg %p79
        %p219 = pneg %p103
        %p220 = pneg %p100
        %p221 = pneg %p129
        %p222 = pneg %p126
        %s223 = sand.u32 %s116, 1
        %s224 = scalar_lea.sflag [#allocation5], %s223
        %s225 = sand.u32 %s116, 1
        %s226 = smul.addr %s225, 128
        %s227 = scalar_lea.vmem [#allocation8], %s226
        %s228 = smul.u32 16, %s25
        %s229 = smul.u32 16, %s26
        %s230 = smul.u32 16, %s25
        %p232 = scmp.eq.s32.totalorder %s26, 0
        // Predicated region
        $region41: #{tpu_custom_call.1} parent=31 // pred_check
          %p233 = pneg %p232
        $region42: #{tpu_custom_call.1} parent=31 // pred_check_branch
          %235 = sbr.rel (%p233) target = $region44
        $region43: #{tpu_custom_call.1} parent=31 // pred_region
          %236 = vst [vmem:[#allocation2] sm:$0xff] 0.0
          %237 = vst [vmem:[#allocation2 + $0x8] sm:$0xff] 0.0
          %238 = vst [vmem:[#allocation2 + $0x10] sm:$0xff] 0.0
          %239 = vst [vmem:[#allocation2 + $0x18] sm:$0xff] 0.0
          %240 = vst [vmem:[#allocation2 + $0x20] sm:$0xff] 0.0
          %241 = vst [vmem:[#allocation2 + $0x28] sm:$0xff] 0.0
          %242 = vst [vmem:[#allocation2 + $0x30] sm:$0xff] 0.0
          %243 = vst [vmem:[#allocation2 + $0x38] sm:$0xff] 0.0
          %244 = vst [vmem:[#allocation2 + $0x40] sm:$0xff] 0.0
          %245 = vst [vmem:[#allocation2 + $0x48] sm:$0xff] 0.0
          %246 = vst [vmem:[#allocation2 + $0x50] sm:$0xff] 0.0
          %247 = vst [vmem:[#allocation2 + $0x58] sm:$0xff] 0.0
          %248 = vst [vmem:[#allocation2 + $0x60] sm:$0xff] 0.0
          %249 = vst [vmem:[#allocation2 + $0x68] sm:$0xff] 0.0
          %250 = vst [vmem:[#allocation2 + $0x70] sm:$0xff] 0.0
          %251 = vst [vmem:[#allocation2 + $0x78] sm:$0xff] 0.0
          %252 = vst [vmem:[#allocation2 + $0x80] sm:$0xff] 0.0
          %253 = vst [vmem:[#allocation2 + $0x88] sm:$0xff] 0.0
          %254 = vst [vmem:[#allocation2 + $0x90] sm:$0xff] 0.0
          %255 = vst [vmem:[#allocation2 + $0x98] sm:$0xff] 0.0
          %256 = vst [vmem:[#allocation2 + $0xa0] sm:$0xff] 0.0
          %257 = vst [vmem:[#allocation2 + $0xa8] sm:$0xff] 0.0
          %258 = vst [vmem:[#allocation2 + $0xb0] sm:$0xff] 0.0
          %259 = vst [vmem:[#allocation2 + $0xb8] sm:$0xff] 0.0
          %260 = vst [vmem:[#allocation2 + $0xc0] sm:$0xff] 0.0
          %261 = vst [vmem:[#allocation2 + $0xc8] sm:$0xff] 0.0
          %262 = vst [vmem:[#allocation2 + $0xd0] sm:$0xff] 0.0
          %263 = vst [vmem:[#allocation2 + $0xd8] sm:$0xff] 0.0
          %264 = vst [vmem:[#allocation2 + $0xe0] sm:$0xff] 0.0
          %265 = vst [vmem:[#allocation2 + $0xe8] sm:$0xff] 0.0
          %266 = vst [vmem:[#allocation2 + $0xf0] sm:$0xff] 0.0
          %267 = vst [vmem:[#allocation2 + $0xf8] sm:$0xff] 0.0
        $region44: #{tpu_custom_call.1} parent=31 // pred_fallthru
          _
        %v268 = vld [vmem:[%s201] sm:$0xff]
        %v269 = vld [vmem:[%s201 + $0x8] sm:$0xff]
        %v270 = vld [vmem:[%s201 + $0x10] sm:$0xff]
        %v271 = vld [vmem:[%s201 + $0x18] sm:$0xff]
        %v272 = vld [vmem:[%s201 + $0x20] sm:$0xff]
        %v273 = vld [vmem:[%s201 + $0x28] sm:$0xff]
        %v274 = vld [vmem:[%s201 + $0x30] sm:$0xff]
        %v275 = vld [vmem:[%s201 + $0x38] sm:$0xff]
        %v276 = vld [vmem:[%s201 + $0x40] sm:$0xff]
        %v277 = vld [vmem:[%s201 + $0x48] sm:$0xff]
        %v278 = vld [vmem:[%s201 + $0x50] sm:$0xff]
        %v279 = vld [vmem:[%s201 + $0x58] sm:$0xff]
        %v280 = vld [vmem:[%s201 + $0x60] sm:$0xff]
        %v281 = vld [vmem:[%s201 + $0x68] sm:$0xff]
        %v282 = vld [vmem:[%s201 + $0x70] sm:$0xff]
        %v283 = vld [vmem:[%s201 + $0x78] sm:$0xff]
        %v284 = vld [vmem:[#allocation6] sm:$0xff]
        %v285 = vld [vmem:[#allocation6 + $0x8] sm:$0xff]
        %v286 = vld [vmem:[#allocation6 + $0x10] sm:$0xff]
        %v287 = vld [vmem:[#allocation6 + $0x18] sm:$0xff]
        %v288 = vld [vmem:[#allocation6 + $0x20] sm:$0xff]
        %v289 = vld [vmem:[#allocation6 + $0x28] sm:$0xff]
        %v290 = vld [vmem:[#allocation6 + $0x30] sm:$0xff]
        %v291 = vld [vmem:[#allocation6 + $0x38] sm:$0xff]
        %v292 = vld [vmem:[#allocation6 + $0x40] sm:$0xff]
        %v293 = vld [vmem:[#allocation6 + $0x48] sm:$0xff]
        %v294 = vld [vmem:[#allocation6 + $0x50] sm:$0xff]
        %v295 = vld [vmem:[#allocation6 + $0x58] sm:$0xff]
        %v296 = vld [vmem:[#allocation6 + $0x60] sm:$0xff]
        %v297 = vld [vmem:[#allocation6 + $0x68] sm:$0xff]
        %v298 = vld [vmem:[#allocation6 + $0x70] sm:$0xff]
        %v299 = vld [vmem:[#allocation6 + $0x78] sm:$0xff]
        %v300 = vld [vmem:[#allocation6 + $0x80] sm:$0xff]
        %v301 = vld [vmem:[#allocation6 + $0x88] sm:$0xff]
        %v302 = vld [vmem:[#allocation6 + $0x90] sm:$0xff]
        %v303 = vld [vmem:[#allocation6 + $0x98] sm:$0xff]
        %v304 = vld [vmem:[#allocation6 + $0xa0] sm:$0xff]
        %v305 = vld [vmem:[#allocation6 + $0xa8] sm:$0xff]
        %v306 = vld [vmem:[#allocation6 + $0xb0] sm:$0xff]
        %v307 = vld [vmem:[#allocation6 + $0xb8] sm:$0xff]
        %v308 = vld [vmem:[#allocation6 + $0xc0] sm:$0xff]
        %v309 = vld [vmem:[#allocation6 + $0xc8] sm:$0xff]
        %v310 = vld [vmem:[#allocation6 + $0xd0] sm:$0xff]
        %v311 = vld [vmem:[#allocation6 + $0xd8] sm:$0xff]
        %v312 = vld [vmem:[#allocation6 + $0xe0] sm:$0xff]
        %v313 = vld [vmem:[#allocation6 + $0xe8] sm:$0xff]
        %v314 = vld [vmem:[#allocation6 + $0xf0] sm:$0xff]
        %v315 = vld [vmem:[#allocation6 + $0xf8] sm:$0xff]
        %v316 = vpack.c.bf16 %v269, %v268
        %v317 = vpack.c.bf16 %v271, %v270
        %v318 = vpack.c.bf16 %v273, %v272
        %v319 = vpack.c.bf16 %v275, %v274
        %v320 = vpack.c.bf16 %v277, %v276
        %v321 = vpack.c.bf16 %v279, %v278
        %v322 = vpack.c.bf16 %v281, %v280
        %v323 = vpack.c.bf16 %v283, %v282
        %v324 = vpack.c.bf16 %v286, %v284
        %v325 = vpack.c.bf16 %v287, %v285
        %v326 = vpack.c.bf16 %v290, %v288
        %v327 = vpack.c.bf16 %v291, %v289
        %v328 = vpack.c.bf16 %v294, %v292
        %v329 = vpack.c.bf16 %v295, %v293
        %v330 = vpack.c.bf16 %v298, %v296
        %v331 = vpack.c.bf16 %v299, %v297
        %v332 = vpack.c.bf16 %v302, %v300
        %v333 = vpack.c.bf16 %v303, %v301
        %v334 = vpack.c.bf16 %v306, %v304
        %v335 = vpack.c.bf16 %v307, %v305
        %v336 = vpack.c.bf16 %v310, %v308
        %v337 = vpack.c.bf16 %v311, %v309
        %v338 = vpack.c.bf16 %v314, %v312
        %v339 = vpack.c.bf16 %v315, %v313
        %v340 = vld [vmem:[#allocation2] sm:$0xff]
        %v341 = vld [vmem:[#allocation2 + $0x8] sm:$0xff]
        %v342 = vld [vmem:[#allocation2 + $0x10] sm:$0xff]
        %v343 = vld [vmem:[#allocation2 + $0x18] sm:$0xff]
        %v344 = vld [vmem:[#allocation2 + $0x20] sm:$0xff]
        %v345 = vld [vmem:[#allocation2 + $0x28] sm:$0xff]
        %v346 = vld [vmem:[#allocation2 + $0x30] sm:$0xff]
        %v347 = vld [vmem:[#allocation2 + $0x38] sm:$0xff]
        %v348 = vld [vmem:[#allocation2 + $0x40] sm:$0xff]
        %v349 = vld [vmem:[#allocation2 + $0x48] sm:$0xff]
        %v350 = vld [vmem:[#allocation2 + $0x50] sm:$0xff]
        %v351 = vld [vmem:[#allocation2 + $0x58] sm:$0xff]
        %v352 = vld [vmem:[#allocation2 + $0x60] sm:$0xff]
        %v353 = vld [vmem:[#allocation2 + $0x68] sm:$0xff]
        %v354 = vld [vmem:[#allocation2 + $0x70] sm:$0xff]
        %v355 = vld [vmem:[#allocation2 + $0x78] sm:$0xff]
        %v356 = vld [vmem:[#allocation2 + $0x80] sm:$0xff]
        %v357 = vld [vmem:[#allocation2 + $0x88] sm:$0xff]
        %v358 = vld [vmem:[#allocation2 + $0x90] sm:$0xff]
        %v359 = vld [vmem:[#allocation2 + $0x98] sm:$0xff]
        %v360 = vld [vmem:[#allocation2 + $0xa0] sm:$0xff]
        %v361 = vld [vmem:[#allocation2 + $0xa8] sm:$0xff]
        %v362 = vld [vmem:[#allocation2 + $0xb0] sm:$0xff]
        %v363 = vld [vmem:[#allocation2 + $0xb8] sm:$0xff]
        %v364 = vld [vmem:[#allocation2 + $0xc0] sm:$0xff]
        %v365 = vld [vmem:[#allocation2 + $0xc8] sm:$0xff]
        %v366 = vld [vmem:[#allocation2 + $0xd0] sm:$0xff]
        %v367 = vld [vmem:[#allocation2 + $0xd8] sm:$0xff]
        %v368 = vld [vmem:[#allocation2 + $0xe0] sm:$0xff]
        %v369 = vld [vmem:[#allocation2 + $0xe8] sm:$0xff]
        %v370 = vld [vmem:[#allocation2 + $0xf0] sm:$0xff]
        %v371 = vld [vmem:[#allocation2 + $0xf8] sm:$0xff]
        %372 = vmatprep.subr.bf16.mxu0 %v339
        %373 = vmatpush1.bf16.msra.mxu0 %v338
        %374 = vmatprep.subr.bf16.mxu0 %v337
        %375 = vmatpush1.bf16.msra.mxu0 %v336
        %376 = vmatprep.subr.bf16.mxu0 %v335
        %377 = vmatpush1.bf16.msra.mxu0 %v334
        %378 = vmatprep.subr.bf16.mxu0 %v333
        %379 = vmatpush1.bf16.msra.mxu0 %v332
        %380 = vmatprep.subr.bf16.mxu0 %v331
        %381 = vmatpush1.bf16.msra.mxu0 %v330
        %382 = vmatprep.subr.bf16.mxu0 %v329
        %383 = vmatpush1.bf16.msra.mxu0 %v328
        %384 = vmatprep.subr.bf16.mxu0 %v327
        %385 = vmatpush1.bf16.msra.mxu0 %v326
        %386 = vmatprep.subr.bf16.mxu0 %v325
        %387 = vmatpush1.bf16.msra.mxu0 %v324
        %388 = vmatprep.subr.bf16.mxu0 0
        %389 = vmatpush2.bf16.msra.mxu0 0
        %390 = vmatprep.subr.bf16.mxu0 0
        %391 = vmatpush2.bf16.msra.mxu0 0
        %392 = vmatprep.subr.bf16.mxu0 0
        %393 = vmatpush2.bf16.msra.mxu0 0
        %394 = vmatprep.subr.bf16.mxu0 0
        %395 = vmatpush2.bf16.msra.mxu0 0
        %396 = vmatprep.subr.bf16.mxu0 0
        %397 = vmatpush2.bf16.msra.mxu0 0
        %398 = vmatprep.subr.bf16.mxu0 0
        %399 = vmatpush2.bf16.msra.mxu0 0
        %400 = vmatprep.subr.bf16.mxu0 0
        %401 = vmatpush2.bf16.msra.mxu0 0
        %402 = vmatprep.subr.bf16.mxu0 0
        %403 = vmatpush2.bf16.msra.mxu0 0
        %404 = vmatprep.mubr.bf16.mxu0 0
        %405 = vmatmul.mubr.bf16.gmra.mxu0 %v316
        %v406 = vpop.f32.mrf.mxu0
        %v407 = vadd.f32 0.0, %v406
        %v408 = vpop.f32.mrf.mxu0
        %v409 = vadd.f32 0.0, %v408
        %v410 = vpop.f32.mrf.mxu0
        %v411 = vadd.f32 0.0, %v410
        %v412 = vpop.f32.mrf.mxu0
        %v413 = vadd.f32 0.0, %v412
        %414 = vmatprep.mubr.bf16.mxu0 0
        %415 = vmatmul.mubr.bf16.gmra.mxu0 %v317
        %v416 = vpop.f32.mrf.mxu0
        %v417 = vadd.f32 0.0, %v416
        %v418 = vpop.f32.mrf.mxu0
        %v419 = vadd.f32 0.0, %v418
        %v420 = vpop.f32.mrf.mxu0
        %v421 = vadd.f32 0.0, %v420
        %v422 = vpop.f32.mrf.mxu0
        %v423 = vadd.f32 0.0, %v422
        %424 = vmatprep.mubr.bf16.mxu0 0
        %425 = vmatmul.mubr.bf16.gmra.mxu0 %v318
        %v426 = vpop.f32.mrf.mxu0
        %v427 = vadd.f32 0.0, %v426
        %v428 = vpop.f32.mrf.mxu0
        %v429 = vadd.f32 0.0, %v428
        %v430 = vpop.f32.mrf.mxu0
        %v431 = vadd.f32 0.0, %v430
        %v432 = vpop.f32.mrf.mxu0
        %v433 = vadd.f32 0.0, %v432
        %434 = vmatprep.mubr.bf16.mxu0 0
        %435 = vmatmul.mubr.bf16.gmra.mxu0 %v319
        %v436 = vpop.f32.mrf.mxu0
        %v437 = vadd.f32 0.0, %v436
        %v438 = vpop.f32.mrf.mxu0
        %v439 = vadd.f32 0.0, %v438
        %v440 = vpop.f32.mrf.mxu0
        %v441 = vadd.f32 0.0, %v440
        %v442 = vpop.f32.mrf.mxu0
        %v443 = vadd.f32 0.0, %v442
        %444 = vmatprep.mubr.bf16.mxu0 0
        %445 = vmatmul.mubr.bf16.gmra.mxu0 %v320
        %v446 = vpop.f32.mrf.mxu0
        %v447 = vadd.f32 0.0, %v446
        %v448 = vpop.f32.mrf.mxu0
        %v449 = vadd.f32 0.0, %v448
        %v450 = vpop.f32.mrf.mxu0
        %v451 = vadd.f32 0.0, %v450
        %v452 = vpop.f32.mrf.mxu0
        %v453 = vadd.f32 0.0, %v452
        %454 = vmatprep.mubr.bf16.mxu0 0
        %455 = vmatmul.mubr.bf16.gmra.mxu0 %v321
        %v456 = vpop.f32.mrf.mxu0
        %v457 = vadd.f32 0.0, %v456
        %v458 = vpop.f32.mrf.mxu0
        %v459 = vadd.f32 0.0, %v458
        %v460 = vpop.f32.mrf.mxu0
        %v461 = vadd.f32 0.0, %v460
        %v462 = vpop.f32.mrf.mxu0
        %v463 = vadd.f32 0.0, %v462
        %464 = vmatprep.mubr.bf16.mxu0 0
        %465 = vmatmul.mubr.bf16.gmra.mxu0 %v322
        %v466 = vpop.f32.mrf.mxu0
        %v467 = vadd.f32 0.0, %v466
        %v468 = vpop.f32.mrf.mxu0
        %v469 = vadd.f32 0.0, %v468
        %v470 = vpop.f32.mrf.mxu0
        %v471 = vadd.f32 0.0, %v470
        %v472 = vpop.f32.mrf.mxu0
        %v473 = vadd.f32 0.0, %v472
        %474 = vmatprep.mubr.bf16.mxu0 0
        %475 = vmatmul.mubr.bf16.gmra.mxu0 %v323
        %v476 = vpop.f32.mrf.mxu0
        %v477 = vadd.f32 0.0, %v476
        %v478 = vpop.f32.mrf.mxu0
        %v479 = vadd.f32 0.0, %v478
        %v480 = vpop.f32.mrf.mxu0
        %v481 = vadd.f32 0.0, %v480
        %v482 = vpop.f32.mrf.mxu0
        %v483 = vadd.f32 0.0, %v482
        %484 = vdwg.mxu0
        %v485 = vadd.f32 %v340, %v407
        %v486 = vadd.f32 %v341, %v409
        %v487 = vadd.f32 %v342, %v411
        %v488 = vadd.f32 %v343, %v413
        %v489 = vadd.f32 %v344, %v417
        %v490 = vadd.f32 %v345, %v419
        %v491 = vadd.f32 %v346, %v421
        %v492 = vadd.f32 %v347, %v423
        %v493 = vadd.f32 %v348, %v427
        %v494 = vadd.f32 %v349, %v429
        %v495 = vadd.f32 %v350, %v431
        %v496 = vadd.f32 %v351, %v433
        %v497 = vadd.f32 %v352, %v437
        %v498 = vadd.f32 %v353, %v439
        %v499 = vadd.f32 %v354, %v441
        %v500 = vadd.f32 %v355, %v443
        %v501 = vadd.f32 %v356, %v447
        %v502 = vadd.f32 %v357, %v449
        %v503 = vadd.f32 %v358, %v451
        %v504 = vadd.f32 %v359, %v453
        %v505 = vadd.f32 %v360, %v457
        %v506 = vadd.f32 %v361, %v459
        %v507 = vadd.f32 %v362, %v461
        %v508 = vadd.f32 %v363, %v463
        %v509 = vadd.f32 %v364, %v467
        %v510 = vadd.f32 %v365, %v469
        %v511 = vadd.f32 %v366, %v471
        %v512 = vadd.f32 %v367, %v473
        %v513 = vadd.f32 %v368, %v477
        %v514 = vadd.f32 %v369, %v479
        %v515 = vadd.f32 %v370, %v481
        %v516 = vadd.f32 %v371, %v483
        %517 = vst [vmem:[#allocation2] sm:$0xff] %v485
        %518 = vst [vmem:[#allocation2 + $0x8] sm:$0xff] %v486
        %519 = vst [vmem:[#allocation2 + $0x10] sm:$0xff] %v487
        %520 = vst [vmem:[#allocation2 + $0x18] sm:$0xff] %v488
        %521 = vst [vmem:[#allocation2 + $0x20] sm:$0xff] %v489
        %522 = vst [vmem:[#allocation2 + $0x28] sm:$0xff] %v490
        %523 = vst [vmem:[#allocation2 + $0x30] sm:$0xff] %v491
        %524 = vst [vmem:[#allocation2 + $0x38] sm:$0xff] %v492
        %525 = vst [vmem:[#allocation2 + $0x40] sm:$0xff] %v493
        %526 = vst [vmem:[#allocation2 + $0x48] sm:$0xff] %v494
        %527 = vst [vmem:[#allocation2 + $0x50] sm:$0xff] %v495
        %528 = vst [vmem:[#allocation2 + $0x58] sm:$0xff] %v496
        %529 = vst [vmem:[#allocation2 + $0x60] sm:$0xff] %v497
        %530 = vst [vmem:[#allocation2 + $0x68] sm:$0xff] %v498
        %531 = vst [vmem:[#allocation2 + $0x70] sm:$0xff] %v499
        %532 = vst [vmem:[#allocation2 + $0x78] sm:$0xff] %v500
        %533 = vst [vmem:[#allocation2 + $0x80] sm:$0xff] %v501
        %534 = vst [vmem:[#allocation2 + $0x88] sm:$0xff] %v502
        %535 = vst [vmem:[#allocation2 + $0x90] sm:$0xff] %v503
        %536 = vst [vmem:[#allocation2 + $0x98] sm:$0xff] %v504
        %537 = vst [vmem:[#allocation2 + $0xa0] sm:$0xff] %v505
        %538 = vst [vmem:[#allocation2 + $0xa8] sm:$0xff] %v506
        %539 = vst [vmem:[#allocation2 + $0xb0] sm:$0xff] %v507
        %540 = vst [vmem:[#allocation2 + $0xb8] sm:$0xff] %v508
        %541 = vst [vmem:[#allocation2 + $0xc0] sm:$0xff] %v509
        %542 = vst [vmem:[#allocation2 + $0xc8] sm:$0xff] %v510
        %543 = vst [vmem:[#allocation2 + $0xd0] sm:$0xff] %v511
        %544 = vst [vmem:[#allocation2 + $0xd8] sm:$0xff] %v512
        %545 = vst [vmem:[#allocation2 + $0xe0] sm:$0xff] %v513
        %546 = vst [vmem:[#allocation2 + $0xe8] sm:$0xff] %v514
        %547 = vst [vmem:[#allocation2 + $0xf0] sm:$0xff] %v515
        %548 = vst [vmem:[#allocation2 + $0xf8] sm:$0xff] %v516
        // Predicated region
        $region45: #{tpu_custom_call.1} parent=31 // pred_check
          %p549 = pneg %p232
        $region46: #{tpu_custom_call.1} parent=31 // pred_check_branch
          %551 = sbr.rel (%p549) target = $region48
        $region47: #{tpu_custom_call.1} parent=31 // pred_region
          %v552 = vld [vmem:[#allocation2] sm:$0xff]
          %v553 = vld [vmem:[#allocation2 + $0x8] sm:$0xff]
          %v554 = vld [vmem:[#allocation2 + $0x10] sm:$0xff]
          %v555 = vld [vmem:[#allocation2 + $0x18] sm:$0xff]
          %v556 = vld [vmem:[#allocation2 + $0x20] sm:$0xff]
          %v557 = vld [vmem:[#allocation2 + $0x28] sm:$0xff]
          %v558 = vld [vmem:[#allocation2 + $0x30] sm:$0xff]
          %v559 = vld [vmem:[#allocation2 + $0x38] sm:$0xff]
          %v560 = vld [vmem:[#allocation2 + $0x40] sm:$0xff]
          %v561 = vld [vmem:[#allocation2 + $0x48] sm:$0xff]
          %v562 = vld [vmem:[#allocation2 + $0x50] sm:$0xff]
          %v563 = vld [vmem:[#allocation2 + $0x58] sm:$0xff]
          %v564 = vld [vmem:[#allocation2 + $0x60] sm:$0xff]
          %v565 = vld [vmem:[#allocation2 + $0x68] sm:$0xff]
          %v566 = vld [vmem:[#allocation2 + $0x70] sm:$0xff]
          %v567 = vld [vmem:[#allocation2 + $0x78] sm:$0xff]
          %v568 = vld [vmem:[#allocation2 + $0x80] sm:$0xff]
          %v569 = vld [vmem:[#allocation2 + $0x88] sm:$0xff]
          %v570 = vld [vmem:[#allocation2 + $0x90] sm:$0xff]
          %v571 = vld [vmem:[#allocation2 + $0x98] sm:$0xff]
          %v572 = vld [vmem:[#allocation2 + $0xa0] sm:$0xff]
          %v573 = vld [vmem:[#allocation2 + $0xa8] sm:$0xff]
          %v574 = vld [vmem:[#allocation2 + $0xb0] sm:$0xff]
          %v575 = vld [vmem:[#allocation2 + $0xb8] sm:$0xff]
          %v576 = vld [vmem:[#allocation2 + $0xc0] sm:$0xff]
          %v577 = vld [vmem:[#allocation2 + $0xc8] sm:$0xff]
          %v578 = vld [vmem:[#allocation2 + $0xd0] sm:$0xff]
          %v579 = vld [vmem:[#allocation2 + $0xd8] sm:$0xff]
          %v580 = vld [vmem:[#allocation2 + $0xe0] sm:$0xff]
          %v581 = vld [vmem:[#allocation2 + $0xe8] sm:$0xff]
          %v582 = vld [vmem:[#allocation2 + $0xf0] sm:$0xff]
          %v583 = vld [vmem:[#allocation2 + $0xf8] sm:$0xff]
          %v584 = vld [vmem:[%s2] sm:$0x3]
          %v586 = vlaneseq
          %v587 = vshrl.u32 %v586, 7
          %v588 = vsub.s32 0, %v587
          %v589 = vrot.slane %v584, %v588
          %v590 = vlaneseq
          %v591 = vshrl.u32 %v590, 7
          %v592 = vsub.s32 1, %v591
          %v593 = vrot.slane %v584, %v592
          %v596 = vadd.f32 %v552, %v589
          %v597 = vadd.f32 %v553, %v593
          %v598 = vadd.f32 %v554, %v589
          %v599 = vadd.f32 %v555, %v593
          %v600 = vadd.f32 %v556, %v589
          %v601 = vadd.f32 %v557, %v593
          %v602 = vadd.f32 %v558, %v589
          %v603 = vadd.f32 %v559, %v593
          %v604 = vadd.f32 %v560, %v589
          %v605 = vadd.f32 %v561, %v593
          %v606 = vadd.f32 %v562, %v589
          %v607 = vadd.f32 %v563, %v593
          %v608 = vadd.f32 %v564, %v589
          %v609 = vadd.f32 %v565, %v593
          %v610 = vadd.f32 %v566, %v589
          %v611 = vadd.f32 %v567, %v593
          %v612 = vadd.f32 %v568, %v589
          %v613 = vadd.f32 %v569, %v593
          %v614 = vadd.f32 %v570, %v589
          %v615 = vadd.f32 %v571, %v593
          %v616 = vadd.f32 %v572, %v589
          %v617 = vadd.f32 %v573, %v593
          %v618 = vadd.f32 %v574, %v589
          %v619 = vadd.f32 %v575, %v593
          %v620 = vadd.f32 %v576, %v589
          %v621 = vadd.f32 %v577, %v593
          %v622 = vadd.f32 %v578, %v589
          %v623 = vadd.f32 %v579, %v593
          %v624 = vadd.f32 %v580, %v589
          %v625 = vadd.f32 %v581, %v593
          %v626 = vadd.f32 %v582, %v589
          %v627 = vadd.f32 %v583, %v593
          %v628 = vmul.f32 %v596, %v597
          %v629 = vmul.f32 %v598, %v599
          %v630 = vmul.f32 %v600, %v601
          %v631 = vmul.f32 %v602, %v603
          %v632 = vmul.f32 %v604, %v605
          %v633 = vmul.f32 %v606, %v607
          %v634 = vmul.f32 %v608, %v609
          %v635 = vmul.f32 %v610, %v611
          %v636 = vmul.f32 %v612, %v613
          %v637 = vmul.f32 %v614, %v615
          %v638 = vmul.f32 %v616, %v617
          %v639 = vmul.f32 %v618, %v619
          %v640 = vmul.f32 %v620, %v621
          %v641 = vmul.f32 %v622, %v623
          %v642 = vmul.f32 %v624, %v625
          %v643 = vmul.f32 %v626, %v627
          %v644 = vxor.u32 %v597, 2147483648
          %v645 = vxor.u32 %v599, 2147483648
          %v646 = vxor.u32 %v601, 2147483648
          %v647 = vxor.u32 %v603, 2147483648
          %v648 = vxor.u32 %v605, 2147483648
          %v649 = vxor.u32 %v607, 2147483648
          %v650 = vxor.u32 %v609, 2147483648
          %v651 = vxor.u32 %v611, 2147483648
          %v652 = vxor.u32 %v613, 2147483648
          %v653 = vxor.u32 %v615, 2147483648
          %v654 = vxor.u32 %v617, 2147483648
          %v655 = vxor.u32 %v619, 2147483648
          %v656 = vxor.u32 %v621, 2147483648
          %v657 = vxor.u32 %v623, 2147483648
          %v658 = vxor.u32 %v625, 2147483648
          %v659 = vxor.u32 %v627, 2147483648
          %v660 = vmul.f32 %v644, 1.442695
          %v661 = vpow.pop %v660
          %v662 = vmul.f32 %v645, 1.442695
          %v663 = vpow.pop %v662
          %v664 = vmul.f32 %v646, 1.442695
          %v665 = vpow.pop %v664
          %v666 = vmul.f32 %v647, 1.442695
          %v667 = vpow.pop %v666
          %v668 = vmul.f32 %v648, 1.442695
          %v669 = vpow.pop %v668
          %v670 = vmul.f32 %v649, 1.442695
          %v671 = vpow.pop %v670
          %v672 = vmul.f32 %v650, 1.442695
          %v673 = vpow.pop %v672
          %v674 = vmul.f32 %v651, 1.442695
          %v675 = vpow.pop %v674
          %v676 = vmul.f32 %v652, 1.442695
          %v677 = vpow.pop %v676
          %v678 = vmul.f32 %v653, 1.442695
          %v679 = vpow.pop %v678
          %v680 = vmul.f32 %v654, 1.442695
          %v681 = vpow.pop %v680
          %v682 = vmul.f32 %v655, 1.442695
          %v683 = vpow.pop %v682
          %v684 = vmul.f32 %v656, 1.442695
          %v685 = vpow.pop %v684
          %v686 = vmul.f32 %v657, 1.442695
          %v687 = vpow.pop %v686
          %v688 = vmul.f32 %v658, 1.442695
          %v689 = vpow.pop %v688
          %v690 = vmul.f32 %v659, 1.442695
          %v691 = vpow.pop %v690
          %v692 = vadd.f32 %v661, 1.0
          %v693 = vadd.f32 %v663, 1.0
          %v694 = vadd.f32 %v665, 1.0
          %v695 = vadd.f32 %v667, 1.0
          %v696 = vadd.f32 %v669, 1.0
          %v697 = vadd.f32 %v671, 1.0
          %v698 = vadd.f32 %v673, 1.0
          %v699 = vadd.f32 %v675, 1.0
          %v700 = vadd.f32 %v677, 1.0
          %v701 = vadd.f32 %v679, 1.0
          %v702 = vadd.f32 %v681, 1.0
          %v703 = vadd.f32 %v683, 1.0
          %v704 = vadd.f32 %v685, 1.0
          %v705 = vadd.f32 %v687, 1.0
          %v706 = vadd.f32 %v689, 1.0
          %v707 = vadd.f32 %v691, 1.0
          %v708 = vrcp.pop %v692
          %v709 = vmul.f32 1.0, %v708
          %v710 = vrcp.pop %v693
          %v711 = vmul.f32 1.0, %v710
          %v712 = vrcp.pop %v694
          %v713 = vmul.f32 1.0, %v712
          %v714 = vrcp.pop %v695
          %v715 = vmul.f32 1.0, %v714
          %v716 = vrcp.pop %v696
          %v717 = vmul.f32 1.0, %v716
          %v718 = vrcp.pop %v697
          %v719 = vmul.f32 1.0, %v718
          %v720 = vrcp.pop %v698
          %v721 = vmul.f32 1.0, %v720
          %v722 = vrcp.pop %v699
          %v723 = vmul.f32 1.0, %v722
          %v724 = vrcp.pop %v700
          %v725 = vmul.f32 1.0, %v724
          %v726 = vrcp.pop %v701
          %v727 = vmul.f32 1.0, %v726
          %v728 = vrcp.pop %v702
          %v729 = vmul.f32 1.0, %v728
          %v730 = vrcp.pop %v703
          %v731 = vmul.f32 1.0, %v730
          %v732 = vrcp.pop %v704
          %v733 = vmul.f32 1.0, %v732
          %v734 = vrcp.pop %v705
          %v735 = vmul.f32 1.0, %v734
          %v736 = vrcp.pop %v706
          %v737 = vmul.f32 1.0, %v736
          %v738 = vrcp.pop %v707
          %v739 = vmul.f32 1.0, %v738
          %v740 = vmul.f32 %v628, %v709
          %v741 = vmul.f32 %v629, %v711
          %v742 = vmul.f32 %v630, %v713
          %v743 = vmul.f32 %v631, %v715
          %v744 = vmul.f32 %v632, %v717
          %v745 = vmul.f32 %v633, %v719
          %v746 = vmul.f32 %v634, %v721
          %v747 = vmul.f32 %v635, %v723
          %v748 = vmul.f32 %v636, %v725
          %v749 = vmul.f32 %v637, %v727
          %v750 = vmul.f32 %v638, %v729
          %v751 = vmul.f32 %v639, %v731
          %v752 = vmul.f32 %v640, %v733
          %v753 = vmul.f32 %v641, %v735
          %v754 = vmul.f32 %v642, %v737
          %v755 = vmul.f32 %v643, %v739
          %756 = vst [vmem:[%s227] sm:$0xff] %v740
          %757 = vst [vmem:[%s227 + $0x8] sm:$0xff] %v741
          %758 = vst [vmem:[%s227 + $0x10] sm:$0xff] %v742
          %759 = vst [vmem:[%s227 + $0x18] sm:$0xff] %v743
          %760 = vst [vmem:[%s227 + $0x20] sm:$0xff] %v744
          %761 = vst [vmem:[%s227 + $0x28] sm:$0xff] %v745
          %762 = vst [vmem:[%s227 + $0x30] sm:$0xff] %v746
          %763 = vst [vmem:[%s227 + $0x38] sm:$0xff] %v747
          %764 = vst [vmem:[%s227 + $0x40] sm:$0xff] %v748
          %765 = vst [vmem:[%s227 + $0x48] sm:$0xff] %v749
          %766 = vst [vmem:[%s227 + $0x50] sm:$0xff] %v750
          %767 = vst [vmem:[%s227 + $0x58] sm:$0xff] %v751
          %768 = vst [vmem:[%s227 + $0x60] sm:$0xff] %v752
          %769 = vst [vmem:[%s227 + $0x68] sm:$0xff] %v753
          %770 = vst [vmem:[%s227 + $0x70] sm:$0xff] %v754
          %771 = vst [vmem:[%s227 + $0x78] sm:$0xff] %v755
        $region48: #{tpu_custom_call.1} parent=31 // pred_fallthru
          _
        %s772 = sand.u32 %s116, 1
        %s773 = scalar_lea.sflag [#allocation5], %s772
        %s774 = sand.u32 %s116, 1
        %s775 = smul.addr %s774, 128
        %s776 = scalar_lea.vmem [#allocation8], %s775
        // Predicated region
        $region49: #{tpu_custom_call.1} parent=31 // pred_check
          %p777 = pneg %p126
        $region50: #{tpu_custom_call.1} parent=31 // pred_check_branch
          %779 = sbr.rel (%p777) target = $region52
        $region51: #{tpu_custom_call.1} parent=31 // pred_region
          %s780 = smul.u32 16, %s25
          %s782 = ssub.s32 2048, 2048
          %783 = vsyncadd %s773, %s782
          %s784 = smul.addr %s780, 128
          %s785 = scalar_lea.hbm %s3, %s784
          %s786 = sshll.u32 %s776, 4
          %s787 = int_to_ptr.vmem [resolvable:$true] %s786
          %792 = dma.vmem_to_hbm [thread:$0]  %s787, 2048, %s785, %s773, 128, 128, 8
        $region52: #{tpu_custom_call.1} parent=31 // pred_fallthru
          _
      $region32: #{tpu_custom_call.1} parent=5 // pred_fallthru
        _
      %p793 = scmp.le.s32.totalorder 2, %s16
      // Predicated region
      $region53: #{tpu_custom_call.1} parent=5 // pred_check
        %p794 = pneg %p793
      $region54: #{tpu_custom_call.1} parent=5 // pred_check_branch
        %796 = sbr.rel (%p794) target = $region56
      $region55: #{tpu_custom_call.1} parent=5 // pred_region
        %s797 = ssub.s32 %s16, 2
        // Predicated region
        $region57: #{tpu_custom_call.1} parent=55 // pred_check
          %p798 = pneg %p132
        $region58: #{tpu_custom_call.1} parent=55 // pred_check_branch
          %800 = sbr.rel (%p798) target = $region60
        $region59: #{tpu_custom_call.1} parent=55 // pred_region
          %s801 = sand.u32 %s117, 1
          %s802 = scalar_lea.sflag [#allocation5], %s801
          %s803 = sand.u32 %s117, 1
          %s804 = smul.addr %s803, 128
          %s805 = scalar_lea.vmem [#allocation8], %s804
          %806 = dma.done %s802, 2048
        $region60: #{tpu_custom_call.1} parent=55 // pred_fallthru
          _
      $region56: #{tpu_custom_call.1} parent=5 // pred_fallthru
        _
    $region6: #{tpu_custom_call.1} parent=1 // loop_footer
      %s20 = sadd.s32 1, %s16
    $region7: #{tpu_custom_call.1} parent=1 // loop_footer_branch
      %15 = sbr.rel target = $region3
    $region8: #{tpu_custom_call.1} parent=1 // loop_exit
      _
    %807 = vsyncpa [#allocation4], 1
    %s808 = scalar_lea.sflag [#allocation4], 1
    %809 = vsyncpa %s808, 1
    %810 = vsyncpa [#allocation7], 1
    %811 = vsyncpa [#allocation5], 1
    %s812 = scalar_lea.sflag [#allocation5], 1
    %813 = vsyncpa %s812, 1

</llo_original>
